<compile_context>
chip_gen: v5e
topology: v5e:2x2
jax: 0.10.0
libtpu: 0.0.40
codegen_flags: <defaults>
</compile_context>

<pallas_src>
from functools import partial

import jax
import jax.numpy as jnp
from jax.experimental import pallas as pl
from jax.experimental.pallas import tpu as pltpu


def coma_critic_kernel(x_ref, w1_ref, b1_ref, w2_ref, b2_ref, w3_ref, b3_ref,
                       q_ref):
    # fc1 + ReLU (f32 accumulate regardless of input dtype)
    h1 = jnp.dot(x_ref[...], w1_ref[...], preferred_element_type=jnp.float32)
    h1 = jnp.maximum(h1 + b1_ref[...], 0.0)
    # fc2 + ReLU
    h2 = jnp.dot(h1.astype(w2_ref.dtype), w2_ref[...],
                 preferred_element_type=jnp.float32)
    h2 = jnp.maximum(h2 + b2_ref[...], 0.0)
    # fc3 (no activation)
    q = jnp.dot(h2.astype(w3_ref.dtype), w3_ref[...],
                preferred_element_type=jnp.float32)
    q_ref[...] = (q + b3_ref[...]).astype(q_ref.dtype)


def _round_up(n, m):
    return ((n + m - 1) // m) * m


@partial(jax.jit, static_argnames=("tm_target", "use_bf16"))
def coma_critic_forward(x, params, *, tm_target=1024, use_bf16=False):
    """x: [B, input_shape] float32; params: dict of w1,b1,w2,b2,w3,b3.

    Returns q: [B, n_actions] float32 (== relu(relu(x@w1+b1)@w2+b2)@w3+b3).
    """
    B, in_dim = x.shape
    h_dim = params["w1"].shape[1]
    n_actions = params["w3"].shape[1]

    # Batch tile: big enough to amortize per-step overhead, but split so the
    # grid has >= 2 steps once B > 8 (keeps both v7x TensorCores busy via the
    # "parallel" batch axis).  Always a multiple of 8 sublanes, and <= 2048 so
    # the v5e scoped-VMEM default is respected.
    tm = min(tm_target, 2048, _round_up(-(-B // 2), 8))
    tm = max(8, tm)
    Bp = _round_up(B, tm)

    # Only the batch dim is padded (zero rows, sliced off at the end).  The
    # feature dims are passed unpadded: every block's trailing dim equals the
    # full array dim, which is a legal TPU block shape.
    x_p = jnp.pad(x, ((0, Bp - B), (0, 0)))

    w1, b1 = params["w1"], params["b1"]
    w2, b2 = params["w2"], params["b2"]
    w3, b3 = params["w3"], params["b3"]

    if use_bf16:
        # v6e/v7x option: bf16 MXU inputs, f32 accumulation, f32 biases.
        x_p = x_p.astype(jnp.bfloat16)
        w1 = w1.astype(jnp.bfloat16)
        w2 = w2.astype(jnp.bfloat16)
        w3 = w3.astype(jnp.bfloat16)

    grid = (Bp // tm,)

    def resident(shape):
        # Same block every grid step -> stays in VMEM across the whole grid.
        return pl.BlockSpec(shape, lambda i: (0, 0))

    q_p = pl.pallas_call(
        coma_critic_kernel,
        out_shape=jax.ShapeDtypeStruct((Bp, n_actions), jnp.float32),
        grid=grid,
        in_specs=[
            pl.BlockSpec((tm, in_dim), lambda i: (i, 0)),     # streamed x tile
            resident((in_dim, h_dim)), resident((1, h_dim)),  # fc1
            resident((h_dim, h_dim)), resident((1, h_dim)),   # fc2
            resident((h_dim, n_actions)), resident((1, n_actions)),  # fc3
        ],
        out_specs=pl.BlockSpec((tm, n_actions), lambda i: (i, 0)),
        compiler_params=pltpu.CompilerParams(
            dimension_semantics=("parallel",)),               # megacore on v7x
    )(x_p, w1, b1, w2, b2, w3, b3)

    return q_p[:B]


def init_params(key, input_shape, critic_dim, n_actions):
    """Deterministic synthetic parameters (uniform, PyTorch-Linear-like scale)."""
    ks = jax.random.split(key, 6)

    def lin(kw, kb, fan_in, fan_out):
        bound = 1.0 / jnp.sqrt(fan_in)
        w = jax.random.uniform(kw, (fan_in, fan_out), jnp.float32, -bound, bound)
        b = jax.random.uniform(kb, (1, fan_out), jnp.float32, -bound, bound)
        return w, b

    w1, b1 = lin(ks[0], ks[1], input_shape, critic_dim)
    w2, b2 = lin(ks[2], ks[3], critic_dim, critic_dim)
    w3, b3 = lin(ks[4], ks[5], critic_dim, n_actions)
    return {"w1": w1, "b1": b1, "w2": w2, "b2": b2, "w3": w3, "b3": b3}


def reference_forward(x, p):
    h1 = jax.nn.relu(x @ p["w1"] + p["b1"])
    h2 = jax.nn.relu(h1 @ p["w2"] + p["b2"])
    return h2 @ p["w3"] + p["b3"]


if __name__ == "__main__":
    # Small shapes implied by the module: a batch of flat critic inputs.
    B, INPUT_SHAPE, CRITIC_DIM, N_ACTIONS = 8, 32, 64, 8

    key = jax.random.PRNGKey(0)
    k_x, k_p, k_big = jax.random.split(key, 3)
    params = init_params(k_p, INPUT_SHAPE, CRITIC_DIM, N_ACTIONS)

    # Toy-sized call (single grid step, tm clamped to 8).
    x = jax.random.normal(k_x, (B, INPUT_SHAPE), jnp.float32)
    q = jax.block_until_ready(coma_critic_forward(x, params))
    q_ref = reference_forward(x, params)
    assert q.shape == (B, N_ACTIONS)
    assert jnp.allclose(q, q_ref, atol=1e-5, rtol=1e-5), "mismatch vs JAX reference"

    # Larger batch (B = batch*agents*timesteps style): tm=512, grid of 2
    # parallel steps, resident weights, unpadded streamed x / q.
    B_BIG = 1024
    x_big = jax.random.normal(k_big, (B_BIG, INPUT_SHAPE), jnp.float32)
    q_big = jax.block_until_ready(coma_critic_forward(x_big, params))
    q_big_ref = reference_forward(x_big, params)
    assert q_big.shape == (B_BIG, N_ACTIONS)
    assert jnp.allclose(q_big, q_big_ref, atol=1e-5, rtol=1e-5), "mismatch (big batch)"

    print("KERNEL_OK")
</pallas_src>

<mosaic_0001>
module attributes {stable_mosaic.version = 11 : i64} {
  func.func @coma_critic_kernel(%arg0: i32, %arg1: memref<8x32xf32, #tpu.memory_space<vmem>>, %arg2: memref<32x64xf32, #tpu.memory_space<vmem>>, %arg3: memref<1x64xf32, #tpu.memory_space<vmem>>, %arg4: memref<64x64xf32, #tpu.memory_space<vmem>>, %arg5: memref<1x64xf32, #tpu.memory_space<vmem>>, %arg6: memref<64x8xf32, #tpu.memory_space<vmem>>, %arg7: memref<1x8xf32, #tpu.memory_space<vmem>>, %arg8: memref<8x8xf32, #tpu.memory_space<vmem>>) attributes {dimension_semantics = [#tpu.dimension_semantics<parallel>], iteration_bounds = array<i64: 1>, scalar_prefetch = 0 : i64, scratch_operands = 0 : i64, tpu.core_type = #tpu.core_type<tc>, window_params = [{transform_indices = @transform_0, window_bounds = array<i64: 8, 32>}, {pipeline_mode = #tpu.pipeline_mode<synchronous>, transform_indices = @transform_1, window_bounds = array<i64: 32, 64>}, {pipeline_mode = #tpu.pipeline_mode<synchronous>, transform_indices = @transform_2, window_bounds = array<i64: 1, 64>}, {pipeline_mode = #tpu.pipeline_mode<synchronous>, transform_indices = @transform_3, window_bounds = array<i64: 64, 64>}, {pipeline_mode = #tpu.pipeline_mode<synchronous>, transform_indices = @transform_4, window_bounds = array<i64: 1, 64>}, {pipeline_mode = #tpu.pipeline_mode<synchronous>, transform_indices = @transform_5, window_bounds = array<i64: 64, 8>}, {pipeline_mode = #tpu.pipeline_mode<synchronous>, transform_indices = @transform_6, window_bounds = array<i64: 1, 8>}, {transform_indices = @transform_7, window_bounds = array<i64: 8, 8>}]} {
    %c0 = arith.constant 0 : index
    %c0_0 = arith.constant 0 : index
    %0 = vector.load %arg1[%c0, %c0_0] : memref<8x32xf32, #tpu.memory_space<vmem>>, vector<8x32xf32>
    %c0_1 = arith.constant 0 : index
    %c0_2 = arith.constant 0 : index
    %1 = vector.load %arg2[%c0_1, %c0_2] : memref<32x64xf32, #tpu.memory_space<vmem>>, vector<32x64xf32>
    %cst = arith.constant dense<0.000000e+00> : vector<8x64xf32>
    %2 = tpu.matmul %0, %1, %cst {dimension_numbers = #tpu.dot_dimension_numbers<[1], [0], [0], [1], [0, 0, 1, 1], [], []>} : vector<8x32xf32>, vector<32x64xf32>, vector<8x64xf32> -> vector<8x64xf32>
    %c0_3 = arith.constant 0 : index
    %c0_4 = arith.constant 0 : index
    %3 = vector.load %arg3[%c0_3, %c0_4] : memref<1x64xf32, #tpu.memory_space<vmem>>, vector<1x64xf32>
    %4 = vector.broadcast %3 : vector<1x64xf32> to vector<8x64xf32>
    %5 = arith.addf %2, %4 : vector<8x64xf32>
    %cst_5 = arith.constant 0.000000e+00 : f32
    %6 = vector.broadcast %cst_5 : f32 to vector<8x64xf32>
    %7 = arith.maximumf %5, %6 : vector<8x64xf32>
    %c0_6 = arith.constant 0 : index
    %c0_7 = arith.constant 0 : index
    %8 = vector.load %arg4[%c0_6, %c0_7] : memref<64x64xf32, #tpu.memory_space<vmem>>, vector<64x64xf32>
    %cst_8 = arith.constant dense<0.000000e+00> : vector<8x64xf32>
    %9 = tpu.matmul %7, %8, %cst_8 {dimension_numbers = #tpu.dot_dimension_numbers<[1], [0], [0], [1], [0, 0, 1, 1], [], []>} : vector<8x64xf32>, vector<64x64xf32>, vector<8x64xf32> -> vector<8x64xf32>
    %c0_9 = arith.constant 0 : index
    %c0_10 = arith.constant 0 : index
    %10 = vector.load %arg5[%c0_9, %c0_10] : memref<1x64xf32, #tpu.memory_space<vmem>>, vector<1x64xf32>
    %11 = vector.broadcast %10 : vector<1x64xf32> to vector<8x64xf32>
    %12 = arith.addf %9, %11 : vector<8x64xf32>
    %cst_11 = arith.constant 0.000000e+00 : f32
    %13 = vector.broadcast %cst_11 : f32 to vector<8x64xf32>
    %14 = arith.maximumf %12, %13 : vector<8x64xf32>
    %c0_12 = arith.constant 0 : index
    %c0_13 = arith.constant 0 : index
    %15 = vector.load %arg6[%c0_12, %c0_13] : memref<64x8xf32, #tpu.memory_space<vmem>>, vector<64x8xf32>
    %cst_14 = arith.constant dense<0.000000e+00> : vector<8x8xf32>
    %16 = tpu.matmul %14, %15, %cst_14 {dimension_numbers = #tpu.dot_dimension_numbers<[1], [0], [0], [1], [0, 0, 1, 1], [], []>} : vector<8x64xf32>, vector<64x8xf32>, vector<8x8xf32> -> vector<8x8xf32>
    %c0_15 = arith.constant 0 : index
    %c0_16 = arith.constant 0 : index
    %17 = vector.load %arg7[%c0_15, %c0_16] : memref<1x8xf32, #tpu.memory_space<vmem>>, vector<1x8xf32>
    %18 = vector.broadcast %17 : vector<1x8xf32> to vector<8x8xf32>
    %19 = arith.addf %16, %18 : vector<8x8xf32>
    %c0_17 = arith.constant 0 : index
    %c0_18 = arith.constant 0 : index
    %20 = vector.load %arg8[%c0_17, %c0_18] : memref<8x8xf32, #tpu.memory_space<vmem>>, vector<8x8xf32>
    tpu.vector_store %arg8[%c0_17, %c0_18], %19 {strides = array<i32>} : memref<8x8xf32, #tpu.memory_space<vmem>>, vector<8x8xf32>,
    return
  }
  func.func @transform_0(%arg0: i32) -> (i32, i32) {
    %c0_i32 = arith.constant 0 : i32
    %c0_i32_0 = arith.constant 0 : i32
    return %arg0, %c0_i32 : i32, i32
  }
  func.func @transform_1(%arg0: i32) -> (i32, i32) {
    %c0_i32 = arith.constant 0 : i32
    %c0_i32_0 = arith.constant 0 : i32
    %c0_i32_1 = arith.constant 0 : i32
    return %c0_i32, %c0_i32_0 : i32, i32
  }
  func.func @transform_2(%arg0: i32) -> (i32, i32) {
    %c0_i32 = arith.constant 0 : i32
    %c0_i32_0 = arith.constant 0 : i32
    %c0_i32_1 = arith.constant 0 : i32
    return %c0_i32, %c0_i32_0 : i32, i32
  }
  func.func @transform_3(%arg0: i32) -> (i32, i32) {
    %c0_i32 = arith.constant 0 : i32
    %c0_i32_0 = arith.constant 0 : i32
    %c0_i32_1 = arith.constant 0 : i32
    return %c0_i32, %c0_i32_0 : i32, i32
  }
  func.func @transform_4(%arg0: i32) -> (i32, i32) {
    %c0_i32 = arith.constant 0 : i32
    %c0_i32_0 = arith.constant 0 : i32
    %c0_i32_1 = arith.constant 0 : i32
    return %c0_i32, %c0_i32_0 : i32, i32
  }
  func.func @transform_5(%arg0: i32) -> (i32, i32) {
    %c0_i32 = arith.constant 0 : i32
    %c0_i32_0 = arith.constant 0 : i32
    %c0_i32_1 = arith.constant 0 : i32
    return %c0_i32, %c0_i32_0 : i32, i32
  }
  func.func @transform_6(%arg0: i32) -> (i32, i32) {
    %c0_i32 = arith.constant 0 : i32
    %c0_i32_0 = arith.constant 0 : i32
    %c0_i32_1 = arith.constant 0 : i32
    return %c0_i32, %c0_i32_0 : i32, i32
  }
  func.func @transform_7(%arg0: i32) -> (i32, i32) {
    %c0_i32 = arith.constant 0 : i32
    %c0_i32_0 = arith.constant 0 : i32
    return %arg0, %c0_i32 : i32, i32
  }
}

</mosaic_0001>

<llo_original>
// kernel: coma_critic_forward.1
$region0: #{coma_critic_forward.1}
  #allocation0 [shape = 'u32[]', space=smem, size = 0x4, offset = 0x4, fixed_abs, tag = 'smem constant byte address 0x4 - core index']
  #allocation1 [shape = 'u32[72,128]{1,0:T(1,128)}', space=vmem, size = 0x9000, scoped, tag = 'internal scratch']
  %s0 = inlined_call_operand.vmem [shape: f32[8,32], index: 0, kind: input, shape index: {}]
  %s1 = inlined_call_operand.hbm [shape: f32[32,64], index: 1, kind: input, shape index: {}]
  %s2 = inlined_call_operand.vmem [shape: f32[1,64], index: 2, kind: input, shape index: {}]
  %s3 = inlined_call_operand.vmem [shape: f32[64,64], index: 3, kind: input, shape index: {}]
  %s4 = inlined_call_operand.vmem [shape: f32[1,64], index: 4, kind: input, shape index: {}]
  %s5 = inlined_call_operand.vmem [shape: f32[64,8], index: 5, kind: input, shape index: {}]
  %s6 = inlined_call_operand.vmem [shape: f32[1,8], index: 6, kind: input, shape index: {}]
  %s7 = inlined_call_operand.hbm [shape: f32[8,8], index: 7, kind: output, shape index: {}]
  %s8 = sld [smem:[#allocation0]]
  $region42: #{coma_critic_forward.1} parent=0
    _
  %s10 = ssub.s32 1, %s8
  %s11 = scalar_select 0, %s10, %s8
  $region1: #{coma_critic_forward.1} parent=0
    #allocation2 [shape = 'u8[16384]{0}', space=vmem, size = 0x4000, scoped, tag = 'input window, operand 1, single buffered']
    #allocation3 [shape = 's32[1]{0}', space=sflag, size = 0x4, scoped, tag = 'scoped memory for coma_critic_forward.1']
    #allocation4 [shape = 's32[1]{0}', space=sflag, size = 0x4, scoped, tag = 'scoped memory for coma_critic_forward.1']
    #allocation5 [shape = 'u8[4096]{0}', space=vmem, size = 0x1000, scoped, tag = 'output window, operand 0, single buffered']
    %12 = vsyncpa [#allocation3], 0
    %13 = vsyncpa [#allocation4], 0
    // Predicated region
    $region2: #{coma_critic_forward.1} parent=1 // pred_check
      _
    $region3: #{coma_critic_forward.1} parent=1 // pred_check_branch
      %15 = sbr.rel (0) target = $region5
    $region4: #{coma_critic_forward.1} parent=1 // pred_region
      _
    $region5: #{coma_critic_forward.1} parent=1 // pred_fallthru
      _
    // Predicated region
    $region6: #{coma_critic_forward.1} parent=1 // pred_check
      _
    $region7: #{coma_critic_forward.1} parent=1 // pred_check_branch
      %17 = sbr.rel (0) target = $region9
    $region8: #{coma_critic_forward.1} parent=1 // pred_region
      %19 = vsyncadd [#allocation3], 0
      %s20 = sshll.u32 %s1, 4
      %s21 = int_to_ptr.hbm [resolvable:$true] %s20
      %s22 = sshll.u32 [#allocation2], 4
      %s23 = int_to_ptr.vmem [resolvable:$true] %s22
      %28 = dma.hbm_to_vmem [thread:$0]  %s21, 512, %s23, [#allocation3], 128, 128, 8
    $region9: #{coma_critic_forward.1} parent=1 // pred_fallthru
      _
    // Predicated region
    $region10: #{coma_critic_forward.1} parent=1 // pred_check
      _
    $region11: #{coma_critic_forward.1} parent=1 // pred_check_branch
      %30 = sbr.rel (0) target = $region13
    $region12: #{coma_critic_forward.1} parent=1 // pred_region
      _
    $region13: #{coma_critic_forward.1} parent=1 // pred_fallthru
      _
    // Predicated region
    $region14: #{coma_critic_forward.1} parent=1 // pred_check
      _
    $region15: #{coma_critic_forward.1} parent=1 // pred_check_branch
      %32 = sbr.rel (0) target = $region17
    $region16: #{coma_critic_forward.1} parent=1 // pred_region
      _
    $region17: #{coma_critic_forward.1} parent=1 // pred_fallthru
      _
    // Predicated region
    $region18: #{coma_critic_forward.1} parent=1 // pred_check
      _
    $region19: #{coma_critic_forward.1} parent=1 // pred_check_branch
      %34 = sbr.rel (0) target = $region21
    $region20: #{coma_critic_forward.1} parent=1 // pred_region
      _
    $region21: #{coma_critic_forward.1} parent=1 // pred_fallthru
      _
    // Predicated region
    $region22: #{coma_critic_forward.1} parent=1 // pred_check
      _
    $region23: #{coma_critic_forward.1} parent=1 // pred_check_branch
      %36 = sbr.rel (0) target = $region25
    $region24: #{coma_critic_forward.1} parent=1 // pred_region
      _
    $region25: #{coma_critic_forward.1} parent=1 // pred_fallthru
      _
    // Predicated region
    $region26: #{coma_critic_forward.1} parent=1 // pred_check
      _
    $region27: #{coma_critic_forward.1} parent=1 // pred_check_branch
      %38 = sbr.rel (0) target = $region29
    $region28: #{coma_critic_forward.1} parent=1 // pred_region
      _
    $region29: #{coma_critic_forward.1} parent=1 // pred_fallthru
      _
    // Predicated region
    $region30: #{coma_critic_forward.1} parent=1 // pred_check
      _
    $region31: #{coma_critic_forward.1} parent=1 // pred_check_branch
      %40 = sbr.rel (0) target = $region33
    $region32: #{coma_critic_forward.1} parent=1 // pred_region
      %42 = dma.done [#allocation3], 512
    $region33: #{coma_critic_forward.1} parent=1 // pred_fallthru
      _
    %v43 = vld [vmem:[%s0] sm:$0xff]
    %v44 = vld [vmem:[#allocation2] sm:$0xff]
    %v45 = vld [vmem:[#allocation2 + $0x8] sm:$0xff]
    %v46 = vld [vmem:[#allocation2 + $0x10] sm:$0xff]
    %v47 = vld [vmem:[#allocation2 + $0x18] sm:$0xff]
    %v48 = vld [vmem:[%s2] sm:$0x1]
    %v50 = vperm.slane %v48, 0
    %vm52 = vcmask 261120
    %v54 = vsel %vm52, %v43, 0
    %56 = vmatpush.msra.mxu0 0.0
    %57 = vmatpush.msra.mxu0 0.0
    %58 = vmatpush.msra.mxu0 0.0
    %59 = vmatpush.msra.mxu0 0.0
    %60 = vmatpush.msra.mxu0 0.0
    %61 = vmatpush.msra.mxu0 0.0
    %62 = vmatpush.msra.mxu0 0.0
    %63 = vmatpush.msra.mxu0 0.0
    %64 = vmatpush.msra.mxu0 0.0
    %65 = vmatpush.msra.mxu0 0.0
    %66 = vmatpush.msra.mxu0 0.0
    %67 = vmatpush.msra.mxu0 0.0
    %68 = vmatpush.msra.mxu0 %v47
    %69 = vmatpush.msra.mxu0 %v46
    %70 = vmatpush.msra.mxu0 %v45
    %71 = vmatpush.msra.mxu0 %v44
    %72 = vmatmul.f32.gmra.mxu0 %v54
    %v73 = vpop.f32.mrf.mxu0
    %v74 = vadd.f32 %v50, %v73
    %75 = vdwg.mxu0
    %v76 = vmax.f32 %v74, 0.0
    %v77 = vld [vmem:[%s3] sm:$0xff]
    %v78 = vld [vmem:[%s3 + $0x8] sm:$0xff]
    %v79 = vld [vmem:[%s3 + $0x10] sm:$0xff]
    %v80 = vld [vmem:[%s3 + $0x18] sm:$0xff]
    %v81 = vld [vmem:[%s3 + $0x20] sm:$0xff]
    %v82 = vld [vmem:[%s3 + $0x28] sm:$0xff]
    %v83 = vld [vmem:[%s3 + $0x30] sm:$0xff]
    %v84 = vld [vmem:[%s3 + $0x38] sm:$0xff]
    %v85 = vld [vmem:[%s4] sm:$0x1]
    %v87 = vperm.slane %v85, 0
    %vm89 = vcmask 523264
    %v91 = vsel %vm89, %v76, 0
    %93 = vmatpush.msra.mxu0 0.0
    %94 = vmatpush.msra.mxu0 0.0
    %95 = vmatpush.msra.mxu0 0.0
    %96 = vmatpush.msra.mxu0 0.0
    %97 = vmatpush.msra.mxu0 0.0
    %98 = vmatpush.msra.mxu0 0.0
    %99 = vmatpush.msra.mxu0 0.0
    %100 = vmatpush.msra.mxu0 0.0
    %101 = vmatpush.msra.mxu0 %v84
    %102 = vmatpush.msra.mxu0 %v83
    %103 = vmatpush.msra.mxu0 %v82
    %104 = vmatpush.msra.mxu0 %v81
    %105 = vmatpush.msra.mxu0 %v80
    %106 = vmatpush.msra.mxu0 %v79
    %107 = vmatpush.msra.mxu0 %v78
    %108 = vmatpush.msra.mxu0 %v77
    %109 = vmatmul.f32.gmra.mxu0 %v91
    %v110 = vpop.f32.mrf.mxu0
    %v111 = vadd.f32 %v87, %v110
    %112 = vdwg.mxu0
    %v113 = vmax.f32 %v111, 0.0
    %v114 = vld [vmem:[%s5] sm:$0xff]
    %v115 = vld [vmem:[%s5 + $0x8] sm:$0xff]
    %v116 = vld [vmem:[%s5 + $0x10] sm:$0xff]
    %v117 = vld [vmem:[%s5 + $0x18] sm:$0xff]
    %v118 = vld [vmem:[%s5 + $0x20] sm:$0xff]
    %v119 = vld [vmem:[%s5 + $0x28] sm:$0xff]
    %v120 = vld [vmem:[%s5 + $0x30] sm:$0xff]
    %v121 = vld [vmem:[%s5 + $0x38] sm:$0xff]
    %v122 = vld [vmem:[%s6] sm:$0x1]
    %v124 = vperm.slane %v122, 0
    %v127 = vsel %vm89, %v113, 0
    %129 = vmatpush.msra.mxu0 0.0
    %130 = vmatpush.msra.mxu0 0.0
    %131 = vmatpush.msra.mxu0 0.0
    %132 = vmatpush.msra.mxu0 0.0
    %133 = vmatpush.msra.mxu0 0.0
    %134 = vmatpush.msra.mxu0 0.0
    %135 = vmatpush.msra.mxu0 0.0
    %136 = vmatpush.msra.mxu0 0.0
    %137 = vmatpush.msra.mxu0 %v121
    %138 = vmatpush.msra.mxu0 %v120
    %139 = vmatpush.msra.mxu0 %v119
    %140 = vmatpush.msra.mxu0 %v118
    %141 = vmatpush.msra.mxu0 %v117
    %142 = vmatpush.msra.mxu0 %v116
    %143 = vmatpush.msra.mxu0 %v115
    %144 = vmatpush.msra.mxu0 %v114
    %145 = vmatmul.f32.gmra.mxu0 %v127
    %v146 = vpop.f32.mrf.mxu0
    %v147 = vadd.f32 %v124, %v146
    %148 = vdwg.mxu0
    %vm149 = vcmask 64512
    %150 = vst.msk [vmem:[#allocation5] sm:$0xff] %vm149, %v147
    // Predicated region
    $region34: #{coma_critic_forward.1} parent=1 // pred_check
      _
    $region35: #{coma_critic_forward.1} parent=1 // pred_check_branch
      %152 = sbr.rel (0) target = $region37
    $region36: #{coma_critic_forward.1} parent=1 // pred_region
      %154 = vsyncadd [#allocation4], 0
      %s156 = sshll.u32 [#allocation5], 4
      %s157 = int_to_ptr.vmem [resolvable:$true] %s156
      %s158 = sshll.u32 %s7, 4
      %s159 = int_to_ptr.hbm [resolvable:$true] %s158
      %161 = dma.vmem_to_hbm [thread:$0]  %s157, 128, %s159, [#allocation4]
    $region37: #{coma_critic_forward.1} parent=1 // pred_fallthru
      _
    // Predicated region
    $region38: #{coma_critic_forward.1} parent=1 // pred_check
      _
    $region39: #{coma_critic_forward.1} parent=1 // pred_check_branch
      %163 = sbr.rel (0) target = $region41
    $region40: #{coma_critic_forward.1} parent=1 // pred_region
      %165 = dma.done [#allocation4], 128
    $region41: #{coma_critic_forward.1} parent=1 // pred_fallthru
      _
    %166 = vsyncpa [#allocation3], 1
    %167 = vsyncpa [#allocation4], 1

</llo_original>
